<compile_context>
chip_gen: v5e
topology: v5e:2x2
jax: 0.10.0
libtpu: 0.0.40
codegen_flags: <defaults>
</compile_context>

<pallas_src>
import functools

import jax
import jax.numpy as jnp
from jax.experimental import pallas as pl
from jax.experimental.pallas import tpu as pltpu

H1 = 256
H2 = 128
_LANE = 128


def _round_up(n, m):
    return ((n + m - 1) // m) * m


def _pad2(a, rows, cols):
    """Zero-pad a 2-D array up to (rows, cols); no-op (no copy) if already that shape."""
    r, c = a.shape
    if r == rows and c == cols:
        return a
    return jnp.pad(a, ((0, rows - r), (0, cols - c)))


def _sigmoid(x):
    # 1/(1+e^-x) == 0.5*tanh(0.5*x)+0.5 : one EUP transcendental instead of exp+divide.
    return 0.5 * jnp.tanh(0.5 * x) + 0.5


def _mlp_kernel(x_ref, w1_ref, b1_ref, w2_ref, b2_ref, w3_ref, b3_ref, o_ref):
    """d = sigmoid(sigmoid(x@W1+b1)@W2+b2)@W3+b3 for one batch tile.

    Matmul operands stay in the storage dtype (bf16 on the fast path) so the
    MXU takes its fast path; accumulation / bias add / sigmoid are f32.
    """
    x = x_ref[...]
    h1 = jnp.dot(x, w1_ref[...], preferred_element_type=jnp.float32)
    h1 = _sigmoid(h1 + b1_ref[...])                # f32 activations
    h1 = h1.astype(w2_ref.dtype)                   # bf16 operand for next matmul
    h2 = jnp.dot(h1, w2_ref[...], preferred_element_type=jnp.float32)
    h2 = _sigmoid(h2 + b2_ref[...])
    h2 = h2.astype(w3_ref.dtype)
    d = jnp.dot(h2, w3_ref[...], preferred_element_type=jnp.float32)
    o_ref[...] = (d + b3_ref[...]).astype(o_ref.dtype)


def _derive_vmem_limit(block_b, x_dim_p, d_dim_p, mm_bytes, out_bytes):
    """Size the scoped-VMEM request from the actual tile/weight footprint."""
    stream = 2 * block_b * (x_dim_p * mm_bytes + d_dim_p * out_bytes)      # double-buffered x / out tiles
    weights = 2 * (x_dim_p * H1 + H1 * H2 + H2 * d_dim_p) * mm_bytes       # resident weights (default 2 bufs)
    biases = 2 * 8 * (H1 + H2 + d_dim_p) * 4                               # sublane-padded f32 biases
    inter = 4 * block_b * (H1 + H2 + d_dim_p) * 4                          # f32 intermediates headroom
    need = stream + weights + biases + inter
    # >= 32 MiB (covers v5e's 16 MiB scoped default), <= 48 MiB (safe for v7x's 64 MiB physical).
    return int(min(max(int(need * 1.5), 32 * 1024 * 1024), 48 * 1024 * 1024))


@functools.partial(jax.jit, static_argnames=("block_b", "use_bf16"))
def label_enhance_net(x, params, *, block_b=None, use_bf16=True):
    """Pallas implementation of LabelEnhanceNet.forward.

    x: (B, x_dim) float32
    params: dict with w1 (x_dim,256), b1 (1,256), w2 (256,128), b2 (1,128),
            w3 (128,d_dim), b3 (1,d_dim)
    returns: (B, d_dim) float32
    """
    B, x_dim = x.shape
    d_dim = params["w3"].shape[1]

    # ---- lane padding targets (layout plumbing, fused into the cast/pad) ----
    x_dim_p = _round_up(x_dim, _LANE)
    d_dim_p = _round_up(d_dim, _LANE)

    mm_dtype = jnp.bfloat16 if use_bf16 else jnp.float32
    mm_bytes = 2 if use_bf16 else 4

    # ---- batch tile choice --------------------------------------------------
    if block_b is None:
        sub = 16 if use_bf16 else 8               # min sublane tile for operand dtype
        if B < 32:
            block_b = _round_up(B, sub)           # single grid step
        else:
            # >=2 grid steps (both v7x TensorCores busy); tiles capped near 1024
            # rows, which is ~85%+ of HBM roofline yet tiny in VMEM.
            n_tiles = max(2, -(-B // 1024))
            block_b = _round_up(-(-B // n_tiles), sub)
    B_p = _round_up(B, block_b)
    grid = (B_p // block_b,)

    # ---- operand prep: cast + pad fused by XLA, skipped when already aligned -
    x_p = _pad2(x.astype(mm_dtype), B_p, x_dim_p)
    w1 = _pad2(params["w1"].astype(mm_dtype), x_dim_p, H1)
    w2 = params["w2"].astype(mm_dtype)
    w3 = _pad2(params["w3"].astype(mm_dtype), H2, d_dim_p)
    # biases stay f32 (added to the f32 accumulator)
    b1 = params["b1"].astype(jnp.float32)
    b2 = params["b2"].astype(jnp.float32)
    b3 = _pad2(params["b3"].astype(jnp.float32), 1, d_dim_p)

    def const(shape):
        # whole array, same block every grid step (weights/biases stay resident)
        # TODO(synk): single-buffer these via pipeline_mode=pl.Buffered(1) once
        # confirmed supported by the installed Mosaic pipeline (minor VMEM win).
        return pl.BlockSpec(shape, lambda i: (0, 0))

    out = pl.pallas_call(
        _mlp_kernel,
        # output written in the matmul dtype (bf16 fast path) -> halves writeback
        out_shape=jax.ShapeDtypeStruct((B_p, d_dim_p), mm_dtype),
        grid=grid,
        in_specs=[
            pl.BlockSpec((block_b, x_dim_p), lambda i: (i, 0)),   # x batch tile
            const((x_dim_p, H1)), const((1, H1)),
            const((H1, H2)),      const((1, H2)),
            const((H2, d_dim_p)), const((1, d_dim_p)),
        ],
        out_specs=pl.BlockSpec((block_b, d_dim_p), lambda i: (i, 0)),
        compiler_params=pltpu.CompilerParams(
            # TODO(synk): on v7x, pltpu.CORE_PARALLEL on this axis shards the >=2
            # batch tiles across both TensorCores explicitly.
            dimension_semantics=("parallel",),
            vmem_limit_bytes=_derive_vmem_limit(block_b, x_dim_p, d_dim_p,
                                                mm_bytes, mm_bytes),
        ),
    )(x_p, w1, b1, w2, b2, w3, b3)

    # un-pad + cast back to f32: a single fused slice/convert (no-op slice when
    # nothing was padded).
    return out[:B, :d_dim].astype(jnp.float32)


def init_params(key, x_dim, d_dim):
    """Deterministic init mimicking PyTorch nn.Linear default (U[-1/sqrt(fan_in), 1/sqrt(fan_in)])."""
    ks = jax.random.split(key, 6)

    def linear(kw, kb, fan_in, fan_out):
        bound = 1.0 / jnp.sqrt(fan_in)
        w = jax.random.uniform(kw, (fan_in, fan_out), jnp.float32, -bound, bound)
        b = jax.random.uniform(kb, (1, fan_out), jnp.float32, -bound, bound)
        return w, b

    w1, b1 = linear(ks[0], ks[1], x_dim, H1)
    w2, b2 = linear(ks[2], ks[3], H1, H2)
    w3, b3 = linear(ks[4], ks[5], H2, d_dim)
    return dict(w1=w1, b1=b1, w2=w2, b2=b2, w3=w3, b3=b3)


def reference_forward(x, p):
    h1 = jax.nn.sigmoid(x @ p["w1"] + p["b1"])
    h2 = jax.nn.sigmoid(h1 @ p["w2"] + p["b2"])
    return h2 @ p["w3"] + p["b3"]


if __name__ == "__main__":
    key = jax.random.PRNGKey(0)
    k_x, k_p = jax.random.split(key)

    B, X_DIM, D_DIM = 16, 32, 16   # small shapes: batch=16, feature dim=32, label dim=16
    x = jax.random.normal(k_x, (B, X_DIM), dtype=jnp.float32)
    params = init_params(k_p, X_DIM, D_DIM)
    d_ref = reference_forward(x, params)

    # f32-operand path: must match the reference tightly at these shapes.
    # TODO(synk): for strict f32 matching at large dims, thread
    # precision=lax.Precision.HIGHEST through the kernel's dots once Mosaic's
    # dot_general precision support is confirmed on the target jax version.
    d_f32 = jax.block_until_ready(label_enhance_net(x, params, use_bf16=False))
    assert d_f32.shape == (B, D_DIM)
    assert jnp.allclose(d_f32, d_ref, atol=2e-5, rtol=2e-5), "f32 path mismatch vs reference"

    # fast path (bf16 operands + bf16 writeback, f32 accumulation): looser tolerance.
    d = jax.block_until_ready(label_enhance_net(x, params))
    assert d.shape == (B, D_DIM)
    assert jnp.allclose(d, d_ref, atol=3e-2, rtol=3e-2), "bf16 path mismatch vs reference"

    print("KERNEL_OK")
</pallas_src>

<mosaic_0001>
module attributes {stable_mosaic.version = 11 : i64} {
  func.func @_mlp_kernel(%arg0: i32, %arg1: memref<16x128xf32, #tpu.memory_space<vmem>>, %arg2: memref<128x256xf32, #tpu.memory_space<vmem>>, %arg3: memref<1x256xf32, #tpu.memory_space<vmem>>, %arg4: memref<256x128xf32, #tpu.memory_space<vmem>>, %arg5: memref<1x128xf32, #tpu.memory_space<vmem>>, %arg6: memref<128x128xf32, #tpu.memory_space<vmem>>, %arg7: memref<1x128xf32, #tpu.memory_space<vmem>>, %arg8: memref<16x128xf32, #tpu.memory_space<vmem>>) attributes {dimension_semantics = [#tpu.dimension_semantics<parallel>], iteration_bounds = array<i64: 1>, scalar_prefetch = 0 : i64, scratch_operands = 0 : i64, tpu.core_type = #tpu.core_type<tc>, window_params = [{transform_indices = @transform_0, window_bounds = array<i64: 16, 128>}, {pipeline_mode = #tpu.pipeline_mode<synchronous>, transform_indices = @transform_1, window_bounds = array<i64: 128, 256>}, {pipeline_mode = #tpu.pipeline_mode<synchronous>, transform_indices = @transform_2, window_bounds = array<i64: 1, 256>}, {pipeline_mode = #tpu.pipeline_mode<synchronous>, transform_indices = @transform_3, window_bounds = array<i64: 256, 128>}, {pipeline_mode = #tpu.pipeline_mode<synchronous>, transform_indices = @transform_4, window_bounds = array<i64: 1, 128>}, {pipeline_mode = #tpu.pipeline_mode<synchronous>, transform_indices = @transform_5, window_bounds = array<i64: 128, 128>}, {pipeline_mode = #tpu.pipeline_mode<synchronous>, transform_indices = @transform_6, window_bounds = array<i64: 1, 128>}, {transform_indices = @transform_7, window_bounds = array<i64: 16, 128>}]} {
    %c0 = arith.constant 0 : index
    %c0_0 = arith.constant 0 : index
    %0 = vector.load %arg1[%c0, %c0_0] : memref<16x128xf32, #tpu.memory_space<vmem>>, vector<16x128xf32>
    %c0_1 = arith.constant 0 : index
    %c0_2 = arith.constant 0 : index
    %1 = vector.load %arg2[%c0_1, %c0_2] : memref<128x256xf32, #tpu.memory_space<vmem>>, vector<128x256xf32>
    %cst = arith.constant dense<0.000000e+00> : vector<16x256xf32>
    %2 = tpu.matmul %0, %1, %cst {dimension_numbers = #tpu.dot_dimension_numbers<[1], [0], [0], [1], [0, 0, 1, 1], [], []>} : vector<16x128xf32>, vector<128x256xf32>, vector<16x256xf32> -> vector<16x256xf32>
    %c0_3 = arith.constant 0 : index
    %c0_4 = arith.constant 0 : index
    %3 = vector.load %arg3[%c0_3, %c0_4] : memref<1x256xf32, #tpu.memory_space<vmem>>, vector<1x256xf32>
    %4 = vector.broadcast %3 : vector<1x256xf32> to vector<16x256xf32>
    %5 = arith.addf %2, %4 : vector<16x256xf32>
    %cst_5 = arith.constant 5.000000e-01 : f32
    %6 = vector.broadcast %cst_5 : f32 to vector<16x256xf32>
    %7 = arith.mulf %6, %5 : vector<16x256xf32>
    %8 = math.tanh %7 : vector<16x256xf32>
    %cst_6 = arith.constant 5.000000e-01 : f32
    %9 = vector.broadcast %cst_6 : f32 to vector<16x256xf32>
    %10 = arith.mulf %9, %8 : vector<16x256xf32>
    %cst_7 = arith.constant 5.000000e-01 : f32
    %11 = vector.broadcast %cst_7 : f32 to vector<16x256xf32>
    %12 = arith.addf %10, %11 : vector<16x256xf32>
    %c0_8 = arith.constant 0 : index
    %c0_9 = arith.constant 0 : index
    %13 = vector.load %arg4[%c0_8, %c0_9] : memref<256x128xf32, #tpu.memory_space<vmem>>, vector<256x128xf32>
    %cst_10 = arith.constant dense<0.000000e+00> : vector<16x128xf32>
    %14 = tpu.matmul %12, %13, %cst_10 {dimension_numbers = #tpu.dot_dimension_numbers<[1], [0], [0], [1], [0, 0, 1, 1], [], []>} : vector<16x256xf32>, vector<256x128xf32>, vector<16x128xf32> -> vector<16x128xf32>
    %c0_11 = arith.constant 0 : index
    %c0_12 = arith.constant 0 : index
    %15 = vector.load %arg5[%c0_11, %c0_12] : memref<1x128xf32, #tpu.memory_space<vmem>>, vector<1x128xf32>
    %16 = vector.broadcast %15 : vector<1x128xf32> to vector<16x128xf32>
    %17 = arith.addf %14, %16 : vector<16x128xf32>
    %cst_13 = arith.constant 5.000000e-01 : f32
    %18 = vector.broadcast %cst_13 : f32 to vector<16x128xf32>
    %19 = arith.mulf %18, %17 : vector<16x128xf32>
    %20 = math.tanh %19 : vector<16x128xf32>
    %cst_14 = arith.constant 5.000000e-01 : f32
    %21 = vector.broadcast %cst_14 : f32 to vector<16x128xf32>
    %22 = arith.mulf %21, %20 : vector<16x128xf32>
    %cst_15 = arith.constant 5.000000e-01 : f32
    %23 = vector.broadcast %cst_15 : f32 to vector<16x128xf32>
    %24 = arith.addf %22, %23 : vector<16x128xf32>
    %c0_16 = arith.constant 0 : index
    %c0_17 = arith.constant 0 : index
    %25 = vector.load %arg6[%c0_16, %c0_17] : memref<128x128xf32, #tpu.memory_space<vmem>>, vector<128x128xf32>
    %cst_18 = arith.constant dense<0.000000e+00> : vector<16x128xf32>
    %26 = tpu.matmul %24, %25, %cst_18 {dimension_numbers = #tpu.dot_dimension_numbers<[1], [0], [0], [1], [0, 0, 1, 1], [], []>} : vector<16x128xf32>, vector<128x128xf32>, vector<16x128xf32> -> vector<16x128xf32>
    %c0_19 = arith.constant 0 : index
    %c0_20 = arith.constant 0 : index
    %27 = vector.load %arg7[%c0_19, %c0_20] : memref<1x128xf32, #tpu.memory_space<vmem>>, vector<1x128xf32>
    %28 = vector.broadcast %27 : vector<1x128xf32> to vector<16x128xf32>
    %29 = arith.addf %26, %28 : vector<16x128xf32>
    %c0_21 = arith.constant 0 : index
    %c0_22 = arith.constant 0 : index
    %30 = vector.load %arg8[%c0_21, %c0_22] : memref<16x128xf32, #tpu.memory_space<vmem>>, vector<16x128xf32>
    tpu.vector_store %arg8[%c0_21, %c0_22], %29 {strides = array<i32>} : memref<16x128xf32, #tpu.memory_space<vmem>>, vector<16x128xf32>,
    return
  }
  func.func @transform_0(%arg0: i32) -> (i32, i32) {
    %c0_i32 = arith.constant 0 : i32
    %c0_i32_0 = arith.constant 0 : i32
    return %arg0, %c0_i32 : i32, i32
  }
  func.func @transform_1(%arg0: i32) -> (i32, i32) {
    %c0_i32 = arith.constant 0 : i32
    %c0_i32_0 = arith.constant 0 : i32
    %c0_i32_1 = arith.constant 0 : i32
    return %c0_i32, %c0_i32_0 : i32, i32
  }
  func.func @transform_2(%arg0: i32) -> (i32, i32) {
    %c0_i32 = arith.constant 0 : i32
    %c0_i32_0 = arith.constant 0 : i32
    %c0_i32_1 = arith.constant 0 : i32
    return %c0_i32, %c0_i32_0 : i32, i32
  }
  func.func @transform_3(%arg0: i32) -> (i32, i32) {
    %c0_i32 = arith.constant 0 : i32
    %c0_i32_0 = arith.constant 0 : i32
    %c0_i32_1 = arith.constant 0 : i32
    return %c0_i32, %c0_i32_0 : i32, i32
  }
  func.func @transform_4(%arg0: i32) -> (i32, i32) {
    %c0_i32 = arith.constant 0 : i32
    %c0_i32_0 = arith.constant 0 : i32
    %c0_i32_1 = arith.constant 0 : i32
    return %c0_i32, %c0_i32_0 : i32, i32
  }
  func.func @transform_5(%arg0: i32) -> (i32, i32) {
    %c0_i32 = arith.constant 0 : i32
    %c0_i32_0 = arith.constant 0 : i32
    %c0_i32_1 = arith.constant 0 : i32
    return %c0_i32, %c0_i32_0 : i32, i32
  }
  func.func @transform_6(%arg0: i32) -> (i32, i32) {
    %c0_i32 = arith.constant 0 : i32
    %c0_i32_0 = arith.constant 0 : i32
    %c0_i32_1 = arith.constant 0 : i32
    return %c0_i32, %c0_i32_0 : i32, i32
  }
  func.func @transform_7(%arg0: i32) -> (i32, i32) {
    %c0_i32 = arith.constant 0 : i32
    %c0_i32_0 = arith.constant 0 : i32
    return %arg0, %c0_i32 : i32, i32
  }
}

</mosaic_0001>

<llo_original>
// kernel: label_enhance_net.1
$region0: #{label_enhance_net.1}
  #allocation0 [shape = 'u32[]', space=smem, size = 0x4, offset = 0x4, fixed_abs, tag = 'smem constant byte address 0x4 - core index']
  #allocation1 [shape = 'u32[72,128]{1,0:T(1,128)}', space=vmem, size = 0x9000, scoped, tag = 'internal scratch']
  %s0 = inlined_call_operand.vmem [shape: f32[16,128], index: 0, kind: input, shape index: {}]
  %s1 = inlined_call_operand.vmem [shape: f32[128,256], index: 1, kind: input, shape index: {}]
  %s2 = inlined_call_operand.vmem [shape: f32[1,256], index: 2, kind: input, shape index: {}]
  %s3 = inlined_call_operand.vmem [shape: f32[256,128], index: 3, kind: input, shape index: {}]
  %s4 = inlined_call_operand.vmem [shape: f32[1,128], index: 4, kind: input, shape index: {}]
  %s5 = inlined_call_operand.vmem [shape: f32[128,128], index: 5, kind: input, shape index: {}]
  %s6 = inlined_call_operand.vmem [shape: f32[1,128], index: 6, kind: input, shape index: {}]
  %s7 = inlined_call_operand.hbm [shape: f32[16,128], index: 7, kind: output, shape index: {}]
  %s8 = sld [smem:[#allocation0]]
  $region38: #{label_enhance_net.1} parent=0
    _
  %s10 = ssub.s32 1, %s8
  %s11 = scalar_select 0, %s10, %s8
  $region1: #{label_enhance_net.1} parent=0
    #allocation2 [shape = 'u8[8192]{0}', space=vmem, size = 0x2000, scoped, tag = 'output window, operand 0, single buffered']
    #allocation3 [shape = 's32[1]{0}', space=sflag, size = 0x4, scoped, tag = 'scoped memory for label_enhance_net.1']
    %12 = vsyncpa [#allocation3], 0
    // Predicated region
    $region2: #{label_enhance_net.1} parent=1 // pred_check
      _
    $region3: #{label_enhance_net.1} parent=1 // pred_check_branch
      %14 = sbr.rel (0) target = $region5
    $region4: #{label_enhance_net.1} parent=1 // pred_region
      _
    $region5: #{label_enhance_net.1} parent=1 // pred_fallthru
      _
    // Predicated region
    $region6: #{label_enhance_net.1} parent=1 // pred_check
      _
    $region7: #{label_enhance_net.1} parent=1 // pred_check_branch
      %16 = sbr.rel (0) target = $region9
    $region8: #{label_enhance_net.1} parent=1 // pred_region
      _
    $region9: #{label_enhance_net.1} parent=1 // pred_fallthru
      _
    // Predicated region
    $region10: #{label_enhance_net.1} parent=1 // pred_check
      _
    $region11: #{label_enhance_net.1} parent=1 // pred_check_branch
      %18 = sbr.rel (0) target = $region13
    $region12: #{label_enhance_net.1} parent=1 // pred_region
      _
    $region13: #{label_enhance_net.1} parent=1 // pred_fallthru
      _
    // Predicated region
    $region14: #{label_enhance_net.1} parent=1 // pred_check
      _
    $region15: #{label_enhance_net.1} parent=1 // pred_check_branch
      %20 = sbr.rel (0) target = $region17
    $region16: #{label_enhance_net.1} parent=1 // pred_region
      _
    $region17: #{label_enhance_net.1} parent=1 // pred_fallthru
      _
    // Predicated region
    $region18: #{label_enhance_net.1} parent=1 // pred_check
      _
    $region19: #{label_enhance_net.1} parent=1 // pred_check_branch
      %22 = sbr.rel (0) target = $region21
    $region20: #{label_enhance_net.1} parent=1 // pred_region
      _
    $region21: #{label_enhance_net.1} parent=1 // pred_fallthru
      _
    // Predicated region
    $region22: #{label_enhance_net.1} parent=1 // pred_check
      _
    $region23: #{label_enhance_net.1} parent=1 // pred_check_branch
      %24 = sbr.rel (0) target = $region25
    $region24: #{label_enhance_net.1} parent=1 // pred_region
      _
    $region25: #{label_enhance_net.1} parent=1 // pred_fallthru
      _
    // Predicated region
    $region26: #{label_enhance_net.1} parent=1 // pred_check
      _
    $region27: #{label_enhance_net.1} parent=1 // pred_check_branch
      %26 = sbr.rel (0) target = $region29
    $region28: #{label_enhance_net.1} parent=1 // pred_region
      _
    $region29: #{label_enhance_net.1} parent=1 // pred_fallthru
      _
    %v27 = vld [vmem:[%s0] sm:$0xff]
    %v28 = vld [vmem:[%s0 + $0x8] sm:$0xff]
    %v29 = vld [vmem:[%s1] sm:$0xff]
    %v30 = vld [vmem:[%s1 + $0x8] sm:$0xff]
    %v31 = vld [vmem:[%s1 + $0x10] sm:$0xff]
    %v32 = vld [vmem:[%s1 + $0x18] sm:$0xff]
    %v33 = vld [vmem:[%s1 + $0x20] sm:$0xff]
    %v34 = vld [vmem:[%s1 + $0x28] sm:$0xff]
    %v35 = vld [vmem:[%s1 + $0x30] sm:$0xff]
    %v36 = vld [vmem:[%s1 + $0x38] sm:$0xff]
    %v37 = vld [vmem:[%s1 + $0x40] sm:$0xff]
    %v38 = vld [vmem:[%s1 + $0x48] sm:$0xff]
    %v39 = vld [vmem:[%s1 + $0x50] sm:$0xff]
    %v40 = vld [vmem:[%s1 + $0x58] sm:$0xff]
    %v41 = vld [vmem:[%s1 + $0x60] sm:$0xff]
    %v42 = vld [vmem:[%s1 + $0x68] sm:$0xff]
    %v43 = vld [vmem:[%s1 + $0x70] sm:$0xff]
    %v44 = vld [vmem:[%s1 + $0x78] sm:$0xff]
    %v45 = vld [vmem:[%s1 + $0x80] sm:$0xff]
    %v46 = vld [vmem:[%s1 + $0x88] sm:$0xff]
    %v47 = vld [vmem:[%s1 + $0x90] sm:$0xff]
    %v48 = vld [vmem:[%s1 + $0x98] sm:$0xff]
    %v49 = vld [vmem:[%s1 + $0xa0] sm:$0xff]
    %v50 = vld [vmem:[%s1 + $0xa8] sm:$0xff]
    %v51 = vld [vmem:[%s1 + $0xb0] sm:$0xff]
    %v52 = vld [vmem:[%s1 + $0xb8] sm:$0xff]
    %v53 = vld [vmem:[%s1 + $0xc0] sm:$0xff]
    %v54 = vld [vmem:[%s1 + $0xc8] sm:$0xff]
    %v55 = vld [vmem:[%s1 + $0xd0] sm:$0xff]
    %v56 = vld [vmem:[%s1 + $0xd8] sm:$0xff]
    %v57 = vld [vmem:[%s1 + $0xe0] sm:$0xff]
    %v58 = vld [vmem:[%s1 + $0xe8] sm:$0xff]
    %v59 = vld [vmem:[%s1 + $0xf0] sm:$0xff]
    %v60 = vld [vmem:[%s1 + $0xf8] sm:$0xff]
    %v61 = vld [vmem:[%s2] sm:$0x3]
    %v63 = vperm.slane %v61, 0
    %v64 = vperm.slane %v61, 1
    %67 = vmatpush.msra.mxu0 %v59
    %68 = vmatpush.msra.mxu0 %v57
    %69 = vmatpush.msra.mxu0 %v55
    %70 = vmatpush.msra.mxu0 %v53
    %71 = vmatpush.msra.mxu0 %v51
    %72 = vmatpush.msra.mxu0 %v49
    %73 = vmatpush.msra.mxu0 %v47
    %74 = vmatpush.msra.mxu0 %v45
    %75 = vmatpush.msra.mxu0 %v43
    %76 = vmatpush.msra.mxu0 %v41
    %77 = vmatpush.msra.mxu0 %v39
    %78 = vmatpush.msra.mxu0 %v37
    %79 = vmatpush.msra.mxu0 %v35
    %80 = vmatpush.msra.mxu0 %v33
    %81 = vmatpush.msra.mxu0 %v31
    %82 = vmatpush.msra.mxu0 %v29
    %83 = vmatmul.f32.gmra.mxu0 %v27
    %v84 = vpop.f32.mrf.mxu0
    %v85 = vadd.f32 %v63, %v84
    %86 = vmatmul.f32.gmra.mxu0 %v28
    %v87 = vpop.f32.mrf.mxu0
    %v88 = vadd.f32 %v63, %v87
    %89 = vdwg.mxu0
    %90 = vmatpush.msra.mxu0 %v60
    %91 = vmatpush.msra.mxu0 %v58
    %92 = vmatpush.msra.mxu0 %v56
    %93 = vmatpush.msra.mxu0 %v54
    %94 = vmatpush.msra.mxu0 %v52
    %95 = vmatpush.msra.mxu0 %v50
    %96 = vmatpush.msra.mxu0 %v48
    %97 = vmatpush.msra.mxu0 %v46
    %98 = vmatpush.msra.mxu0 %v44
    %99 = vmatpush.msra.mxu0 %v42
    %100 = vmatpush.msra.mxu0 %v40
    %101 = vmatpush.msra.mxu0 %v38
    %102 = vmatpush.msra.mxu0 %v36
    %103 = vmatpush.msra.mxu0 %v34
    %104 = vmatpush.msra.mxu0 %v32
    %105 = vmatpush.msra.mxu0 %v30
    %106 = vmatmul.f32.gmra.mxu0 %v27
    %v107 = vpop.f32.mrf.mxu0
    %v108 = vadd.f32 %v64, %v107
    %109 = vmatmul.f32.gmra.mxu0 %v28
    %v110 = vpop.f32.mrf.mxu0
    %v111 = vadd.f32 %v64, %v110
    %112 = vdwg.mxu0
    %v113 = vmul.f32 %v85, 0.5
    %v114 = vmul.f32 %v108, 0.5
    %v115 = vmul.f32 %v88, 0.5
    %v116 = vmul.f32 %v111, 0.5
    %v117 = vtanh.pop %v113
    %v118 = vtanh.pop %v114
    %v119 = vtanh.pop %v115
    %v120 = vtanh.pop %v116
    %v121 = vmul.f32 %v117, 0.5
    %v122 = vmul.f32 %v118, 0.5
    %v123 = vmul.f32 %v119, 0.5
    %v124 = vmul.f32 %v120, 0.5
    %v125 = vadd.f32 %v121, 0.5
    %v126 = vadd.f32 %v122, 0.5
    %v127 = vadd.f32 %v123, 0.5
    %v128 = vadd.f32 %v124, 0.5
    %v129 = vld [vmem:[%s3] sm:$0xff]
    %v130 = vld [vmem:[%s3 + $0x8] sm:$0xff]
    %v131 = vld [vmem:[%s3 + $0x10] sm:$0xff]
    %v132 = vld [vmem:[%s3 + $0x18] sm:$0xff]
    %v133 = vld [vmem:[%s3 + $0x20] sm:$0xff]
    %v134 = vld [vmem:[%s3 + $0x28] sm:$0xff]
    %v135 = vld [vmem:[%s3 + $0x30] sm:$0xff]
    %v136 = vld [vmem:[%s3 + $0x38] sm:$0xff]
    %v137 = vld [vmem:[%s3 + $0x40] sm:$0xff]
    %v138 = vld [vmem:[%s3 + $0x48] sm:$0xff]
    %v139 = vld [vmem:[%s3 + $0x50] sm:$0xff]
    %v140 = vld [vmem:[%s3 + $0x58] sm:$0xff]
    %v141 = vld [vmem:[%s3 + $0x60] sm:$0xff]
    %v142 = vld [vmem:[%s3 + $0x68] sm:$0xff]
    %v143 = vld [vmem:[%s3 + $0x70] sm:$0xff]
    %v144 = vld [vmem:[%s3 + $0x78] sm:$0xff]
    %v145 = vld [vmem:[%s3 + $0x80] sm:$0xff]
    %v146 = vld [vmem:[%s3 + $0x88] sm:$0xff]
    %v147 = vld [vmem:[%s3 + $0x90] sm:$0xff]
    %v148 = vld [vmem:[%s3 + $0x98] sm:$0xff]
    %v149 = vld [vmem:[%s3 + $0xa0] sm:$0xff]
    %v150 = vld [vmem:[%s3 + $0xa8] sm:$0xff]
    %v151 = vld [vmem:[%s3 + $0xb0] sm:$0xff]
    %v152 = vld [vmem:[%s3 + $0xb8] sm:$0xff]
    %v153 = vld [vmem:[%s3 + $0xc0] sm:$0xff]
    %v154 = vld [vmem:[%s3 + $0xc8] sm:$0xff]
    %v155 = vld [vmem:[%s3 + $0xd0] sm:$0xff]
    %v156 = vld [vmem:[%s3 + $0xd8] sm:$0xff]
    %v157 = vld [vmem:[%s3 + $0xe0] sm:$0xff]
    %v158 = vld [vmem:[%s3 + $0xe8] sm:$0xff]
    %v159 = vld [vmem:[%s3 + $0xf0] sm:$0xff]
    %v160 = vld [vmem:[%s3 + $0xf8] sm:$0xff]
    %v161 = vld [vmem:[%s4] sm:$0x1]
    %v163 = vperm.slane %v161, 0
    %165 = vmatpush.msra.mxu0 %v144
    %166 = vmatpush.msra.mxu0 %v143
    %167 = vmatpush.msra.mxu0 %v142
    %168 = vmatpush.msra.mxu0 %v141
    %169 = vmatpush.msra.mxu0 %v140
    %170 = vmatpush.msra.mxu0 %v139
    %171 = vmatpush.msra.mxu0 %v138
    %172 = vmatpush.msra.mxu0 %v137
    %173 = vmatpush.msra.mxu0 %v136
    %174 = vmatpush.msra.mxu0 %v135
    %175 = vmatpush.msra.mxu0 %v134
    %176 = vmatpush.msra.mxu0 %v133
    %177 = vmatpush.msra.mxu0 %v132
    %178 = vmatpush.msra.mxu0 %v131
    %179 = vmatpush.msra.mxu0 %v130
    %180 = vmatpush.msra.mxu0 %v129
    %181 = vmatmul.f32.gmra.mxu0 %v125
    %v182 = vpop.f32.mrf.mxu0
    %v183 = vadd.f32 %v163, %v182
    %184 = vmatmul.f32.gmra.mxu0 %v127
    %v185 = vpop.f32.mrf.mxu0
    %v186 = vadd.f32 %v163, %v185
    %187 = vdwg.mxu0
    %188 = vmatpush.msra.mxu0 %v160
    %189 = vmatpush.msra.mxu0 %v159
    %190 = vmatpush.msra.mxu0 %v158
    %191 = vmatpush.msra.mxu0 %v157
    %192 = vmatpush.msra.mxu0 %v156
    %193 = vmatpush.msra.mxu0 %v155
    %194 = vmatpush.msra.mxu0 %v154
    %195 = vmatpush.msra.mxu0 %v153
    %196 = vmatpush.msra.mxu0 %v152
    %197 = vmatpush.msra.mxu0 %v151
    %198 = vmatpush.msra.mxu0 %v150
    %199 = vmatpush.msra.mxu0 %v149
    %200 = vmatpush.msra.mxu0 %v148
    %201 = vmatpush.msra.mxu0 %v147
    %202 = vmatpush.msra.mxu0 %v146
    %203 = vmatpush.msra.mxu0 %v145
    %204 = vmatmul.f32.gmra.mxu0 %v126
    %v205 = vpop.f32.mrf.mxu0
    %v206 = vadd.f32 %v183, %v205
    %207 = vmatmul.f32.gmra.mxu0 %v128
    %v208 = vpop.f32.mrf.mxu0
    %v209 = vadd.f32 %v186, %v208
    %210 = vdwg.mxu0
    %v211 = vmul.f32 %v206, 0.5
    %v212 = vmul.f32 %v209, 0.5
    %v213 = vtanh.pop %v211
    %v214 = vtanh.pop %v212
    %v215 = vmul.f32 %v213, 0.5
    %v216 = vmul.f32 %v214, 0.5
    %v217 = vadd.f32 %v215, 0.5
    %v218 = vadd.f32 %v216, 0.5
    %v219 = vld [vmem:[%s5] sm:$0xff]
    %v220 = vld [vmem:[%s5 + $0x8] sm:$0xff]
    %v221 = vld [vmem:[%s5 + $0x10] sm:$0xff]
    %v222 = vld [vmem:[%s5 + $0x18] sm:$0xff]
    %v223 = vld [vmem:[%s5 + $0x20] sm:$0xff]
    %v224 = vld [vmem:[%s5 + $0x28] sm:$0xff]
    %v225 = vld [vmem:[%s5 + $0x30] sm:$0xff]
    %v226 = vld [vmem:[%s5 + $0x38] sm:$0xff]
    %v227 = vld [vmem:[%s5 + $0x40] sm:$0xff]
    %v228 = vld [vmem:[%s5 + $0x48] sm:$0xff]
    %v229 = vld [vmem:[%s5 + $0x50] sm:$0xff]
    %v230 = vld [vmem:[%s5 + $0x58] sm:$0xff]
    %v231 = vld [vmem:[%s5 + $0x60] sm:$0xff]
    %v232 = vld [vmem:[%s5 + $0x68] sm:$0xff]
    %v233 = vld [vmem:[%s5 + $0x70] sm:$0xff]
    %v234 = vld [vmem:[%s5 + $0x78] sm:$0xff]
    %v235 = vld [vmem:[%s6] sm:$0x1]
    %v237 = vperm.slane %v235, 0
    %239 = vmatpush.msra.mxu0 %v234
    %240 = vmatpush.msra.mxu0 %v233
    %241 = vmatpush.msra.mxu0 %v232
    %242 = vmatpush.msra.mxu0 %v231
    %243 = vmatpush.msra.mxu0 %v230
    %244 = vmatpush.msra.mxu0 %v229
    %245 = vmatpush.msra.mxu0 %v228
    %246 = vmatpush.msra.mxu0 %v227
    %247 = vmatpush.msra.mxu0 %v226
    %248 = vmatpush.msra.mxu0 %v225
    %249 = vmatpush.msra.mxu0 %v224
    %250 = vmatpush.msra.mxu0 %v223
    %251 = vmatpush.msra.mxu0 %v222
    %252 = vmatpush.msra.mxu0 %v221
    %253 = vmatpush.msra.mxu0 %v220
    %254 = vmatpush.msra.mxu0 %v219
    %255 = vmatmul.f32.gmra.mxu0 %v217
    %v256 = vpop.f32.mrf.mxu0
    %v257 = vadd.f32 %v237, %v256
    %258 = vmatmul.f32.gmra.mxu0 %v218
    %v259 = vpop.f32.mrf.mxu0
    %v260 = vadd.f32 %v237, %v259
    %261 = vdwg.mxu0
    %262 = vst [vmem:[#allocation2] sm:$0xff] %v257
    %263 = vst [vmem:[#allocation2 + $0x8] sm:$0xff] %v260
    // Predicated region
    $region30: #{label_enhance_net.1} parent=1 // pred_check
      _
    $region31: #{label_enhance_net.1} parent=1 // pred_check_branch
      %265 = sbr.rel (0) target = $region33
    $region32: #{label_enhance_net.1} parent=1 // pred_region
      %267 = vsyncadd [#allocation3], 0
      %s268 = sshll.u32 [#allocation2], 4
      %s269 = int_to_ptr.vmem [resolvable:$true] %s268
      %s270 = sshll.u32 %s7, 4
      %s271 = int_to_ptr.hbm [resolvable:$true] %s270
      %276 = dma.vmem_to_hbm [thread:$0]  %s269, 256, %s271, [#allocation3], 128, 128, 8
    $region33: #{label_enhance_net.1} parent=1 // pred_fallthru
      _
    // Predicated region
    $region34: #{label_enhance_net.1} parent=1 // pred_check
      _
    $region35: #{label_enhance_net.1} parent=1 // pred_check_branch
      %278 = sbr.rel (0) target = $region37
    $region36: #{label_enhance_net.1} parent=1 // pred_region
      %280 = dma.done [#allocation3], 256
    $region37: #{label_enhance_net.1} parent=1 // pred_fallthru
      _
    %281 = vsyncpa [#allocation3], 1

</llo_original>
